<compile_context>
chip_gen: v7x
topology: tpu7x:2x2x1
jax: 0.10.0
libtpu: 0.0.40
codegen_flags: <defaults>
</compile_context>

<pallas_src>
import jax
import jax.numpy as jnp
from jax.experimental import pallas as pl
from jax.experimental.pallas import tpu as pltpu


NUM_STREAMS = 4  # geo_rep, geo_dis, vol_ratio, dist_feat
_LANE = 128


def _round_up(v, m):
    return (v + m - 1) // m * m


def feature_fusion_kernel(x_ref, g_ref, w1_ref, b1_ref, w2_ref, b2_ref,
                          r_ref, s_ref, o_ref):
    g = g_ref[...]  # [TB, 4F] lane-dense packed streams

    # Linear(4F -> F//2): one full-K matmul on the packed stream.
    h = (jnp.dot(g, w1_ref[...], preferred_element_type=jnp.float32)
         + b1_ref[...].astype(jnp.float32))
    h = jnp.maximum(h, 0.0)  # ReLU

    # Linear(F//2 -> 4)
    logits = (jnp.dot(h, w2_ref[...], preferred_element_type=jnp.float32)
              + b2_ref[...].astype(jnp.float32))

    # Softmax over the 4 fusion weights (f32).  The divide goes to the EUP
    # slot via approximate reciprocal (free issue slot; kernel is mem-bound).
    # NOTE: rows past B in the grid-padded last block run exp() on undefined
    # data; every op in this kernel is strictly row-wise and padded rows are
    # never stored, so that is benign.  Do not add cross-row reductions here
    # without masking.
    m = jnp.max(logits, axis=-1, keepdims=True)
    e = jnp.exp(logits - m)
    w = e * pl.reciprocal(jnp.sum(e, axis=-1, keepdims=True), approx=True)

    # Weighted sum without leaving the lane-dense layout:
    #   w_big    = w @ R           -> broadcasts weight k over its stream's F lanes
    #   weighted = (g * w_big) @ S -> collapses the 4 lane groups back to F lanes
    # Both are tiny MXU matmuls (free in a mem-bound kernel) instead of four
    # masked 32-lane broadcast-multiplies.
    w_big = jnp.dot(w, r_ref[...], preferred_element_type=jnp.float32)
    weighted = jnp.dot(g.astype(jnp.float32) * w_big, s_ref[...],
                       preferred_element_type=jnp.float32)

    # Explicit cast on the store so bf16 x / bf16 output refs are handled.
    o_ref[...] = (x_ref[...].astype(jnp.float32) + weighted).astype(o_ref.dtype)


def feature_fusion(x, geo_rep, geo_dis, vol_ratio, dist_feat, w1, b1, w2, b2,
                   *, tb_cap=8192, vmem_budget_bytes=32 * 1024 * 1024):
    """w1: [4F, F//2], b1: [F//2], w2: [F//2, 4], b2: [4]  (already [in, out])."""
    B, F = x.shape
    K = NUM_STREAMS * F
    H = w1.shape[1]
    assert w1.shape == (K, H)
    assert w2.shape == (H, NUM_STREAMS)

    # Pack the four F-wide streams into one lane-dense [B, 4F] array.  For
    # F=32 this fills all 128 lanes of each vreg on the g path.  (In a real
    # model the upstream producer should emit this packed layout directly.)
    g_packed = jnp.concatenate([geo_rep, geo_dis, vol_ratio, dist_feat], axis=-1)

    b1_2d = b1.reshape(1, H)
    b2_2d = b2.reshape(1, NUM_STREAMS)

    # Constant broadcast / selection matrices (resident in VMEM):
    #   R[k, k*F + j] = 1   (w @ R broadcasts weight k across its F lanes)
    #   S[k*F + j, j] = 1   ((.) @ S sums the 4 lane groups back to F lanes)
    R = jnp.repeat(jnp.eye(NUM_STREAMS, dtype=jnp.float32), F, axis=1)  # [4, 4F]
    S = jnp.tile(jnp.eye(F, dtype=jnp.float32), (NUM_STREAMS, 1))       # [4F, F]

    # ---- batch tile size ---------------------------------------------------
    # Padded-lane accounting: a [TB, F] block really occupies
    # TB * round_up(F, 128) * itemsize bytes in VMEM.  x, g_packed and the
    # output are each double-buffered by the pipeline.
    x_isz = jnp.dtype(x.dtype).itemsize
    g_isz = jnp.dtype(g_packed.dtype).itemsize
    bytes_per_row = 2 * (_round_up(F, _LANE) * x_isz        # x
                         + _round_up(K, _LANE) * g_isz      # packed g streams
                         + _round_up(F, _LANE) * x_isz)     # out (same dtype as x)
    tb = max(8, min(tb_cap, vmem_budget_bytes // bytes_per_row))
    tb = min(tb, B)
    if B >= 16:
        # Guarantee at least 2 grid steps so ("parallel",) can feed both
        # TensorCores on v7x (no-op on v5e/v6e).
        tb = min(tb, _round_up(pl.cdiv(B, 2), 8))
    if tb < B:
        tb = max(8, (tb // 8) * 8)  # sublane alignment when actually tiling
    grid = (pl.cdiv(B, tb),)

    xo_spec = pl.BlockSpec((tb, F), lambda i: (i, 0))
    g_spec = pl.BlockSpec((tb, K), lambda i: (i, 0))

    def resident(shape):  # tiny weights/constants: stay resident across the grid
        return pl.BlockSpec(shape, lambda i: (0, 0))

    return pl.pallas_call(
        feature_fusion_kernel,
        out_shape=jax.ShapeDtypeStruct((B, F), x.dtype),
        grid=grid,
        in_specs=[
            xo_spec,                              # x
            g_spec,                               # packed g streams
            resident((K, H)),                     # w1
            resident((1, H)),                     # b1
            resident((H, NUM_STREAMS)),           # w2
            resident((1, NUM_STREAMS)),           # b2
            resident((NUM_STREAMS, K)),           # R
            resident((K, F)),                     # S
        ],
        out_specs=xo_spec,
        input_output_aliases={0: 0},              # out = x + ... : reuse x's HBM
        compiler_params=pltpu.CompilerParams(
            dimension_semantics=("parallel",),     # v7x: shard batch over 2 TCs
            vmem_limit_bytes=48 * 1024 * 1024,     # padded-aware TB keeps usage < ~25 MiB
        ),
    )(x, g_packed, w1, b1_2d, w2, b2_2d, R, S)


def feature_fusion_ref(x, g1, g2, g3, g4, w1, b1, w2, b2):
    combined = jnp.concatenate([g1, g2, g3, g4], axis=-1)
    h = jnp.maximum(combined @ w1 + b1, 0.0)
    w = jax.nn.softmax(h @ w2 + b2, axis=-1)
    ws = (w[:, 0:1] * g1 + w[:, 1:2] * g2 + w[:, 2:3] * g3 + w[:, 3:4] * g4)
    return x + ws


if __name__ == "__main__":
    B = 8
    FEAT_DIM = 32          # feat_dim
    HIDDEN = FEAT_DIM // 2

    key = jax.random.PRNGKey(0)
    ks = jax.random.split(key, 9)
    x         = jax.random.normal(ks[0], (B, FEAT_DIM), dtype=jnp.float32)
    geo_rep   = jax.random.normal(ks[1], (B, FEAT_DIM), dtype=jnp.float32)
    geo_dis   = jax.random.normal(ks[2], (B, FEAT_DIM), dtype=jnp.float32)
    vol_ratio = jax.random.normal(ks[3], (B, FEAT_DIM), dtype=jnp.float32)
    dist_feat = jax.random.normal(ks[4], (B, FEAT_DIM), dtype=jnp.float32)

    # Deterministic synthetic params (nn.Linear shapes, stored as [in, out]).
    w1 = 0.05 * jax.random.normal(ks[5], (NUM_STREAMS * FEAT_DIM, HIDDEN), dtype=jnp.float32)
    b1 = 0.05 * jax.random.normal(ks[6], (HIDDEN,), dtype=jnp.float32)
    w2 = 0.05 * jax.random.normal(ks[7], (HIDDEN, NUM_STREAMS), dtype=jnp.float32)
    b2 = 0.05 * jax.random.normal(ks[8], (NUM_STREAMS,), dtype=jnp.float32)

    # Reference first (the kernel aliases its output onto x's buffer).
    ref = feature_fusion_ref(x, geo_rep, geo_dis, vol_ratio, dist_feat, w1, b1, w2, b2)

    out = feature_fusion(x, geo_rep, geo_dis, vol_ratio, dist_feat, w1, b1, w2, b2)
    out = jax.block_until_ready(out)

    assert out.shape == (B, FEAT_DIM)
    # Slightly relaxed tolerance: pl.reciprocal(approx=True) in the softmax
    # normalization trades a few e-4 relative error for a free EUP slot, so the
    # four fusion weights sum to 1 only to ~1e-3.
    assert jnp.allclose(out, ref, atol=2e-3, rtol=2e-3), "mismatch vs reference"

    print("KERNEL_OK")
</pallas_src>

<mosaic_0001>
module attributes {stable_mosaic.version = 11 : i64} {
  func.func @feature_fusion_kernel(%arg0: i32, %arg1: memref<8x32xf32, #tpu.memory_space<vmem>>, %arg2: memref<8x128xf32, #tpu.memory_space<vmem>>, %arg3: memref<128x16xf32, #tpu.memory_space<vmem>>, %arg4: memref<1x16xf32, #tpu.memory_space<vmem>>, %arg5: memref<16x4xf32, #tpu.memory_space<vmem>>, %arg6: memref<1x4xf32, #tpu.memory_space<vmem>>, %arg7: memref<4x128xf32, #tpu.memory_space<vmem>>, %arg8: memref<128x32xf32, #tpu.memory_space<vmem>>, %arg9: memref<8x32xf32, #tpu.memory_space<vmem>>) attributes {dimension_semantics = [#tpu.dimension_semantics<parallel>], iteration_bounds = array<i64: 1>, scalar_prefetch = 0 : i64, scratch_operands = 0 : i64, tpu.core_type = #tpu.core_type<tc>, window_params = [{transform_indices = @transform_0, window_bounds = array<i64: 8, 32>}, {transform_indices = @transform_1, window_bounds = array<i64: 8, 128>}, {pipeline_mode = #tpu.pipeline_mode<synchronous>, transform_indices = @transform_2, window_bounds = array<i64: 128, 16>}, {pipeline_mode = #tpu.pipeline_mode<synchronous>, transform_indices = @transform_3, window_bounds = array<i64: 1, 16>}, {pipeline_mode = #tpu.pipeline_mode<synchronous>, transform_indices = @transform_4, window_bounds = array<i64: 16, 4>}, {pipeline_mode = #tpu.pipeline_mode<synchronous>, transform_indices = @transform_5, window_bounds = array<i64: 1, 4>}, {pipeline_mode = #tpu.pipeline_mode<synchronous>, transform_indices = @transform_6, window_bounds = array<i64: 4, 128>}, {pipeline_mode = #tpu.pipeline_mode<synchronous>, transform_indices = @transform_7, window_bounds = array<i64: 128, 32>}, {transform_indices = @transform_8, window_bounds = array<i64: 8, 32>}]} {
    %c0 = arith.constant 0 : index
    %c0_0 = arith.constant 0 : index
    %0 = vector.load %arg2[%c0, %c0_0] : memref<8x128xf32, #tpu.memory_space<vmem>>, vector<8x128xf32>
    %c0_1 = arith.constant 0 : index
    %c0_2 = arith.constant 0 : index
    %1 = vector.load %arg3[%c0_1, %c0_2] : memref<128x16xf32, #tpu.memory_space<vmem>>, vector<128x16xf32>
    %cst = arith.constant dense<0.000000e+00> : vector<8x16xf32>
    %2 = tpu.matmul %0, %1, %cst {dimension_numbers = #tpu.dot_dimension_numbers<[1], [0], [0], [1], [0, 0, 1, 1], [], []>} : vector<8x128xf32>, vector<128x16xf32>, vector<8x16xf32> -> vector<8x16xf32>
    %c0_3 = arith.constant 0 : index
    %c0_4 = arith.constant 0 : index
    %3 = vector.load %arg4[%c0_3, %c0_4] : memref<1x16xf32, #tpu.memory_space<vmem>>, vector<1x16xf32>
    %4 = vector.broadcast %3 : vector<1x16xf32> to vector<8x16xf32>
    %5 = arith.addf %2, %4 : vector<8x16xf32>
    %cst_5 = arith.constant 0.000000e+00 : f32
    %6 = vector.broadcast %cst_5 : f32 to vector<8x16xf32>
    %7 = arith.maximumf %5, %6 : vector<8x16xf32>
    %c0_6 = arith.constant 0 : index
    %c0_7 = arith.constant 0 : index
    %8 = vector.load %arg5[%c0_6, %c0_7] : memref<16x4xf32, #tpu.memory_space<vmem>>, vector<16x4xf32>
    %cst_8 = arith.constant dense<0.000000e+00> : vector<8x4xf32>
    %9 = tpu.matmul %7, %8, %cst_8 {dimension_numbers = #tpu.dot_dimension_numbers<[1], [0], [0], [1], [0, 0, 1, 1], [], []>} : vector<8x16xf32>, vector<16x4xf32>, vector<8x4xf32> -> vector<8x4xf32>
    %c0_9 = arith.constant 0 : index
    %c0_10 = arith.constant 0 : index
    %10 = vector.load %arg6[%c0_9, %c0_10] : memref<1x4xf32, #tpu.memory_space<vmem>>, vector<1x4xf32>
    %11 = vector.broadcast %10 : vector<1x4xf32> to vector<8x4xf32>
    %12 = arith.addf %9, %11 : vector<8x4xf32>
    %cst_11 = arith.constant dense<0xFF800000> : vector<8xf32>
    %13 = vector.multi_reduction <maximumf>, %12, %cst_11 [1] : vector<8x4xf32> to vector<8xf32>
    %14 = vector.shape_cast %13 : vector<8xf32> to vector<8x1xf32>
    %15 = vector.broadcast %14 : vector<8x1xf32> to vector<8x4xf32>
    %16 = arith.subf %12, %15 : vector<8x4xf32>
    %17 = math.exp %16 : vector<8x4xf32>
    %cst_12 = arith.constant dense<0.000000e+00> : vector<8xf32>
    %18 = vector.multi_reduction <add>, %17, %cst_12 [1] : vector<8x4xf32> to vector<8xf32>
    %19 = vector.shape_cast %18 : vector<8xf32> to vector<8x1xf32>
    %20 = tpu.reciprocal %19 {approx = true} : vector<8x1xf32> -> vector<8x1xf32>
    %21 = vector.broadcast %20 : vector<8x1xf32> to vector<8x4xf32>
    %22 = arith.mulf %17, %21 : vector<8x4xf32>
    %c0_13 = arith.constant 0 : index
    %c0_14 = arith.constant 0 : index
    %23 = vector.load %arg7[%c0_13, %c0_14] : memref<4x128xf32, #tpu.memory_space<vmem>>, vector<4x128xf32>
    %cst_15 = arith.constant dense<0.000000e+00> : vector<8x128xf32>
    %24 = tpu.matmul %22, %23, %cst_15 {dimension_numbers = #tpu.dot_dimension_numbers<[1], [0], [0], [1], [0, 0, 1, 1], [], []>} : vector<8x4xf32>, vector<4x128xf32>, vector<8x128xf32> -> vector<8x128xf32>
    %25 = arith.mulf %0, %24 : vector<8x128xf32>
    %c0_16 = arith.constant 0 : index
    %c0_17 = arith.constant 0 : index
    %26 = vector.load %arg8[%c0_16, %c0_17] : memref<128x32xf32, #tpu.memory_space<vmem>>, vector<128x32xf32>
    %cst_18 = arith.constant dense<0.000000e+00> : vector<8x32xf32>
    %27 = tpu.matmul %25, %26, %cst_18 {dimension_numbers = #tpu.dot_dimension_numbers<[1], [0], [0], [1], [0, 0, 1, 1], [], []>} : vector<8x128xf32>, vector<128x32xf32>, vector<8x32xf32> -> vector<8x32xf32>
    %c0_19 = arith.constant 0 : index
    %c0_20 = arith.constant 0 : index
    %28 = vector.load %arg1[%c0_19, %c0_20] : memref<8x32xf32, #tpu.memory_space<vmem>>, vector<8x32xf32>
    %29 = arith.addf %28, %27 : vector<8x32xf32>
    %c0_21 = arith.constant 0 : index
    %c0_22 = arith.constant 0 : index
    %30 = vector.load %arg9[%c0_21, %c0_22] : memref<8x32xf32, #tpu.memory_space<vmem>>, vector<8x32xf32>
    tpu.vector_store %arg9[%c0_21, %c0_22], %29 {strides = array<i32>} : memref<8x32xf32, #tpu.memory_space<vmem>>, vector<8x32xf32>,
    return
  }
  func.func @transform_0(%arg0: i32) -> (i32, i32) {
    %c0_i32 = arith.constant 0 : i32
    %c0_i32_0 = arith.constant 0 : i32
    return %arg0, %c0_i32 : i32, i32
  }
  func.func @transform_1(%arg0: i32) -> (i32, i32) {
    %c0_i32 = arith.constant 0 : i32
    %c0_i32_0 = arith.constant 0 : i32
    return %arg0, %c0_i32 : i32, i32
  }
  func.func @transform_2(%arg0: i32) -> (i32, i32) {
    %c0_i32 = arith.constant 0 : i32
    %c0_i32_0 = arith.constant 0 : i32
    %c0_i32_1 = arith.constant 0 : i32
    return %c0_i32, %c0_i32_0 : i32, i32
  }
  func.func @transform_3(%arg0: i32) -> (i32, i32) {
    %c0_i32 = arith.constant 0 : i32
    %c0_i32_0 = arith.constant 0 : i32
    %c0_i32_1 = arith.constant 0 : i32
    return %c0_i32, %c0_i32_0 : i32, i32
  }
  func.func @transform_4(%arg0: i32) -> (i32, i32) {
    %c0_i32 = arith.constant 0 : i32
    %c0_i32_0 = arith.constant 0 : i32
    %c0_i32_1 = arith.constant 0 : i32
    return %c0_i32, %c0_i32_0 : i32, i32
  }
  func.func @transform_5(%arg0: i32) -> (i32, i32) {
    %c0_i32 = arith.constant 0 : i32
    %c0_i32_0 = arith.constant 0 : i32
    %c0_i32_1 = arith.constant 0 : i32
    return %c0_i32, %c0_i32_0 : i32, i32
  }
  func.func @transform_6(%arg0: i32) -> (i32, i32) {
    %c0_i32 = arith.constant 0 : i32
    %c0_i32_0 = arith.constant 0 : i32
    %c0_i32_1 = arith.constant 0 : i32
    return %c0_i32, %c0_i32_0 : i32, i32
  }
  func.func @transform_7(%arg0: i32) -> (i32, i32) {
    %c0_i32 = arith.constant 0 : i32
    %c0_i32_0 = arith.constant 0 : i32
    %c0_i32_1 = arith.constant 0 : i32
    return %c0_i32, %c0_i32_0 : i32, i32
  }
  func.func @transform_8(%arg0: i32) -> (i32, i32) {
    %c0_i32 = arith.constant 0 : i32
    %c0_i32_0 = arith.constant 0 : i32
    return %arg0, %c0_i32 : i32, i32
  }
}

</mosaic_0001>

<llo_original>
// kernel: tpu_custom_call.1
$region0: #{tpu_custom_call.1}
  #allocation0 [shape = 'u32[]', space=smem, size = 0x4, offset = 0x4, fixed_abs, tag = 'smem constant byte address 0x4 - core index']
  #allocation1 [shape = 'u32[144,128]{1,0:T(1,128)}', space=vmem, size = 0x12000, scoped, tag = 'internal scratch']
  %s0 = inlined_call_operand.hbm [shape: f32[8,32], index: 0, kind: input, shape index: {}, may-alias: {0,8}]
  %s1 = inlined_call_operand.vmem [shape: f32[8,128], index: 1, kind: input, shape index: {}]
  %s2 = inlined_call_operand.vmem [shape: f32[128,16], index: 2, kind: input, shape index: {}]
  %s3 = inlined_call_operand.vmem [shape: f32[1,16], index: 3, kind: input, shape index: {}]
  %s4 = inlined_call_operand.vmem [shape: f32[16,4], index: 4, kind: input, shape index: {}]
  %s5 = inlined_call_operand.vmem [shape: f32[1,4], index: 5, kind: input, shape index: {}]
  %s6 = inlined_call_operand.vmem [shape: f32[4,128], index: 6, kind: input, shape index: {}]
  %s7 = inlined_call_operand.vmem [shape: f32[128,32], index: 7, kind: input, shape index: {}]
  %s8 = inlined_call_operand.hbm [shape: f32[8,32], index: 8, kind: output, shape index: {}, may-alias: {0,8}]
  %s9 = sld [smem:[#allocation0]]
  $region46: #{tpu_custom_call.1} parent=0
    _
  %s11 = ssub.s32 1, %s9
  %s12 = scalar_select 0, %s11, %s9
  $region1: #{tpu_custom_call.1} parent=0
    #allocation2 [shape = 'u8[4096]{0}', space=vmem, size = 0x1000, scoped, tag = 'input window, operand 0, single buffered']
    #allocation3 [shape = 's32[1]{0}', space=sflag, size = 0x4, scoped, tag = 'scoped memory for tpu_custom_call.1']
    #allocation4 [shape = 's32[1]{0}', space=sflag, size = 0x4, scoped, tag = 'scoped memory for tpu_custom_call.1']
    #allocation5 [shape = 'u8[4096]{0}', space=vmem, size = 0x1000, scoped, tag = 'output window, operand 0, single buffered']
    %13 = vsyncpa [#allocation3], 0
    %14 = vsyncpa [#allocation4], 0
    // Predicated region
    $region2: #{tpu_custom_call.1} parent=1 // pred_check
      _
    $region3: #{tpu_custom_call.1} parent=1 // pred_check_branch
      %16 = sbr.rel (0) target = $region5
    $region4: #{tpu_custom_call.1} parent=1 // pred_region
      %s18 = ssub.s32 128, 128
      %19 = vsyncadd [#allocation3], %s18
      %s21 = sshll.u32 [#allocation2], 4
      %s22 = int_to_ptr.vmem [resolvable:$true] %s21
      %24 = dma.hbm_to_vmem [thread:$0]  %s0, 128, %s22, [#allocation3]
    $region5: #{tpu_custom_call.1} parent=1 // pred_fallthru
      _
    // Predicated region
    $region6: #{tpu_custom_call.1} parent=1 // pred_check
      _
    $region7: #{tpu_custom_call.1} parent=1 // pred_check_branch
      %26 = sbr.rel (0) target = $region9
    $region8: #{tpu_custom_call.1} parent=1 // pred_region
      _
    $region9: #{tpu_custom_call.1} parent=1 // pred_fallthru
      _
    // Predicated region
    $region10: #{tpu_custom_call.1} parent=1 // pred_check
      _
    $region11: #{tpu_custom_call.1} parent=1 // pred_check_branch
      %28 = sbr.rel (0) target = $region13
    $region12: #{tpu_custom_call.1} parent=1 // pred_region
      _
    $region13: #{tpu_custom_call.1} parent=1 // pred_fallthru
      _
    // Predicated region
    $region14: #{tpu_custom_call.1} parent=1 // pred_check
      _
    $region15: #{tpu_custom_call.1} parent=1 // pred_check_branch
      %30 = sbr.rel (0) target = $region17
    $region16: #{tpu_custom_call.1} parent=1 // pred_region
      _
    $region17: #{tpu_custom_call.1} parent=1 // pred_fallthru
      _
    // Predicated region
    $region18: #{tpu_custom_call.1} parent=1 // pred_check
      _
    $region19: #{tpu_custom_call.1} parent=1 // pred_check_branch
      %32 = sbr.rel (0) target = $region21
    $region20: #{tpu_custom_call.1} parent=1 // pred_region
      _
    $region21: #{tpu_custom_call.1} parent=1 // pred_fallthru
      _
    // Predicated region
    $region22: #{tpu_custom_call.1} parent=1 // pred_check
      _
    $region23: #{tpu_custom_call.1} parent=1 // pred_check_branch
      %34 = sbr.rel (0) target = $region25
    $region24: #{tpu_custom_call.1} parent=1 // pred_region
      _
    $region25: #{tpu_custom_call.1} parent=1 // pred_fallthru
      _
    // Predicated region
    $region26: #{tpu_custom_call.1} parent=1 // pred_check
      _
    $region27: #{tpu_custom_call.1} parent=1 // pred_check_branch
      %36 = sbr.rel (0) target = $region29
    $region28: #{tpu_custom_call.1} parent=1 // pred_region
      _
    $region29: #{tpu_custom_call.1} parent=1 // pred_fallthru
      _
    // Predicated region
    $region30: #{tpu_custom_call.1} parent=1 // pred_check
      _
    $region31: #{tpu_custom_call.1} parent=1 // pred_check_branch
      %38 = sbr.rel (0) target = $region33
    $region32: #{tpu_custom_call.1} parent=1 // pred_region
      _
    $region33: #{tpu_custom_call.1} parent=1 // pred_fallthru
      _
    // Predicated region
    $region34: #{tpu_custom_call.1} parent=1 // pred_check
      _
    $region35: #{tpu_custom_call.1} parent=1 // pred_check_branch
      %40 = sbr.rel (0) target = $region37
    $region36: #{tpu_custom_call.1} parent=1 // pred_region
      %41 = dma.done [#allocation3], 128
    $region37: #{tpu_custom_call.1} parent=1 // pred_fallthru
      _
    %v42 = vld [vmem:[%s1] sm:$0xff]
    %v43 = vld [vmem:[%s2] sm:$0xff]
    %v44 = vld [vmem:[%s2 + $0x8] sm:$0xff]
    %v45 = vld [vmem:[%s2 + $0x10] sm:$0xff]
    %v46 = vld [vmem:[%s2 + $0x18] sm:$0xff]
    %v47 = vld [vmem:[%s2 + $0x20] sm:$0xff]
    %v48 = vld [vmem:[%s2 + $0x28] sm:$0xff]
    %v49 = vld [vmem:[%s2 + $0x30] sm:$0xff]
    %v50 = vld [vmem:[%s2 + $0x38] sm:$0xff]
    %v51 = vld [vmem:[%s2 + $0x40] sm:$0xff]
    %v52 = vld [vmem:[%s2 + $0x48] sm:$0xff]
    %v53 = vld [vmem:[%s2 + $0x50] sm:$0xff]
    %v54 = vld [vmem:[%s2 + $0x58] sm:$0xff]
    %v55 = vld [vmem:[%s2 + $0x60] sm:$0xff]
    %v56 = vld [vmem:[%s2 + $0x68] sm:$0xff]
    %v57 = vld [vmem:[%s2 + $0x70] sm:$0xff]
    %v58 = vld [vmem:[%s2 + $0x78] sm:$0xff]
    %v59 = vld [vmem:[%s3] sm:$0x1]
    %v61 = vlaneseq
    %v62 = vshrl.u32 %v61, 7
    %v63 = vsub.s32 0, %v62
    %v64 = vrot.slane %v59, %v63
    %66 = vmatprep.subr.mxu0 0.0
    %67 = vmatpush1.msra.mxu0 %v43
    %68 = vmatprep.subr.mxu0 0.0
    %69 = vmatpush1.msra.mxu0 %v44
    %70 = vmatprep.subr.mxu0 0.0
    %71 = vmatpush1.msra.mxu0 %v45
    %72 = vmatprep.subr.mxu0 0.0
    %73 = vmatpush1.msra.mxu0 %v46
    %74 = vmatprep.subr.mxu0 0.0
    %75 = vmatpush1.msra.mxu0 %v47
    %76 = vmatprep.subr.mxu0 0.0
    %77 = vmatpush1.msra.mxu0 %v48
    %78 = vmatprep.subr.mxu0 0.0
    %79 = vmatpush1.msra.mxu0 %v49
    %80 = vmatprep.subr.mxu0 0.0
    %81 = vmatpush1.msra.mxu0 %v50
    %82 = vmatprep.subr.mxu0 0.0
    %83 = vmatpush1.msra.mxu0 %v51
    %84 = vmatprep.subr.mxu0 0.0
    %85 = vmatpush1.msra.mxu0 %v52
    %86 = vmatprep.subr.mxu0 0.0
    %87 = vmatpush1.msra.mxu0 %v53
    %88 = vmatprep.subr.mxu0 0.0
    %89 = vmatpush1.msra.mxu0 %v54
    %90 = vmatprep.subr.mxu0 0.0
    %91 = vmatpush1.msra.mxu0 %v55
    %92 = vmatprep.subr.mxu0 0.0
    %93 = vmatpush1.msra.mxu0 %v56
    %94 = vmatprep.subr.mxu0 0.0
    %95 = vmatpush1.msra.mxu0 %v57
    %96 = vmatprep.subr.mxu0 0.0
    %97 = vmatpush1.msra.mxu0 %v58
    %98 = vmatprep.subr.mxu0 0.0
    %99 = vmatpush1.msra.mxu0 0.0
    %100 = vmatprep.subr.mxu0 0.0
    %101 = vmatpush1.msra.mxu0 0.0
    %102 = vmatprep.subr.mxu0 0.0
    %103 = vmatpush1.msra.mxu0 0.0
    %104 = vmatprep.subr.mxu0 0.0
    %105 = vmatpush1.msra.mxu0 0.0
    %106 = vmatprep.subr.mxu0 0.0
    %107 = vmatpush1.msra.mxu0 0.0
    %108 = vmatprep.subr.mxu0 0.0
    %109 = vmatpush1.msra.mxu0 0.0
    %110 = vmatprep.subr.mxu0 0.0
    %111 = vmatpush1.msra.mxu0 0.0
    %112 = vmatprep.subr.mxu0 0.0
    %113 = vmatpush1.msra.mxu0 0.0
    %114 = vmatprep.subr.mxu0 0.0
    %115 = vmatpush1.msra.mxu0 0.0
    %116 = vmatprep.subr.mxu0 0.0
    %117 = vmatpush1.msra.mxu0 0.0
    %118 = vmatprep.subr.mxu0 0.0
    %119 = vmatpush1.msra.mxu0 0.0
    %120 = vmatprep.subr.mxu0 0.0
    %121 = vmatpush1.msra.mxu0 0.0
    %122 = vmatprep.subr.mxu0 0.0
    %123 = vmatpush1.msra.mxu0 0.0
    %124 = vmatprep.subr.mxu0 0.0
    %125 = vmatpush1.msra.mxu0 0.0
    %126 = vmatprep.subr.mxu0 0.0
    %127 = vmatpush1.msra.mxu0 0.0
    %128 = vmatprep.subr.mxu0 0.0
    %129 = vmatpush1.msra.mxu0 0.0
    %130 = vmatprep.mubr.f32.mxu0 0.0
    %131 = vmatmul.mubr.f32.gmra.mrb[0].mxu0 %v42
    %v132 = vpop.f32.mrb[0].mxu0
    %v133 = vadd.f32 %v64, %v132
    %v134 = vpop.f32.mrb[0].mxu0
    %135 = vdwg.mxu0
    %v136 = vmax.f32 %v133, 0.0
    %v137 = vld [vmem:[%s4] sm:$0xff]
    %v138 = vld [vmem:[%s4 + $0x8] sm:$0xff]
    %v139 = vld [vmem:[%s5] sm:$0x1]
    %v141 = vlaneseq
    %v142 = vshrl.u32 %v141, 7
    %v143 = vsub.s32 0, %v142
    %v144 = vrot.slane %v139, %v143
    %vm146 = vcmask 130048
    %v148 = vsel %vm146, %v136, 0
    %150 = vmatprep.subr.mxu0 0.0
    %151 = vmatpush1.msra.mxu0 %v137
    %152 = vmatprep.subr.mxu0 0.0
    %153 = vmatpush1.msra.mxu0 %v138
    %154 = vmatprep.subr.mxu0 0.0
    %155 = vmatpush1.msra.mxu0 0.0
    %156 = vmatprep.subr.mxu0 0.0
    %157 = vmatpush1.msra.mxu0 0.0
    %158 = vmatprep.subr.mxu0 0.0
    %159 = vmatpush1.msra.mxu0 0.0
    %160 = vmatprep.subr.mxu0 0.0
    %161 = vmatpush1.msra.mxu0 0.0
    %162 = vmatprep.subr.mxu0 0.0
    %163 = vmatpush1.msra.mxu0 0.0
    %164 = vmatprep.subr.mxu0 0.0
    %165 = vmatpush1.msra.mxu0 0.0
    %166 = vmatprep.subr.mxu0 0.0
    %167 = vmatpush1.msra.mxu0 0.0
    %168 = vmatprep.subr.mxu0 0.0
    %169 = vmatpush1.msra.mxu0 0.0
    %170 = vmatprep.subr.mxu0 0.0
    %171 = vmatpush1.msra.mxu0 0.0
    %172 = vmatprep.subr.mxu0 0.0
    %173 = vmatpush1.msra.mxu0 0.0
    %174 = vmatprep.subr.mxu0 0.0
    %175 = vmatpush1.msra.mxu0 0.0
    %176 = vmatprep.subr.mxu0 0.0
    %177 = vmatpush1.msra.mxu0 0.0
    %178 = vmatprep.subr.mxu0 0.0
    %179 = vmatpush1.msra.mxu0 0.0
    %180 = vmatprep.subr.mxu0 0.0
    %181 = vmatpush1.msra.mxu0 0.0
    %182 = vmatprep.subr.mxu0 0.0
    %183 = vmatpush1.msra.mxu0 0.0
    %184 = vmatprep.subr.mxu0 0.0
    %185 = vmatpush1.msra.mxu0 0.0
    %186 = vmatprep.subr.mxu0 0.0
    %187 = vmatpush1.msra.mxu0 0.0
    %188 = vmatprep.subr.mxu0 0.0
    %189 = vmatpush1.msra.mxu0 0.0
    %190 = vmatprep.subr.mxu0 0.0
    %191 = vmatpush1.msra.mxu0 0.0
    %192 = vmatprep.subr.mxu0 0.0
    %193 = vmatpush1.msra.mxu0 0.0
    %194 = vmatprep.subr.mxu0 0.0
    %195 = vmatpush1.msra.mxu0 0.0
    %196 = vmatprep.subr.mxu0 0.0
    %197 = vmatpush1.msra.mxu0 0.0
    %198 = vmatprep.subr.mxu0 0.0
    %199 = vmatpush1.msra.mxu0 0.0
    %200 = vmatprep.subr.mxu0 0.0
    %201 = vmatpush1.msra.mxu0 0.0
    %202 = vmatprep.subr.mxu0 0.0
    %203 = vmatpush1.msra.mxu0 0.0
    %204 = vmatprep.subr.mxu0 0.0
    %205 = vmatpush1.msra.mxu0 0.0
    %206 = vmatprep.subr.mxu0 0.0
    %207 = vmatpush1.msra.mxu0 0.0
    %208 = vmatprep.subr.mxu0 0.0
    %209 = vmatpush1.msra.mxu0 0.0
    %210 = vmatprep.subr.mxu0 0.0
    %211 = vmatpush1.msra.mxu0 0.0
    %212 = vmatprep.subr.mxu0 0.0
    %213 = vmatpush1.msra.mxu0 0.0
    %214 = vmatprep.mubr.f32.mxu0 0.0
    %215 = vmatmul.mubr.f32.gmra.mrb[0].mxu0 %v148
    %v216 = vpop.f32.mrb[0].mxu0
    %v217 = vadd.f32 %v144, %v216
    %v218 = vpop.f32.mrb[0].mxu0
    %219 = vdwg.mxu0
    %vm220 = vcmask 31744
    %v221 = vsel %vm220, %v217, -inf
    %222 = vmax.xlane.f32.xlu0 %v221
    %v223 = vpop.xlane.xlu0 %222
    %v224 = vsub.f32 %v217, %v223
    %v225 = vmul.f32 %v224, 1.442695
    %v226 = vpow.pop %v225
    %v227 = vsel %vm220, %v226, 0.0
    %228 = vadd.xlane.f32.xlu0 %v227
    %v229 = vpop.xlane.xlu0 %228
    %v230 = vrcp.pop %v229
    %v231 = vmul.f32 %v226, %v230
    %v232 = vld [vmem:[%s6] sm:$0xf]
    %v234 = vsel %vm220, %v231, 0
    %vm236 = vcmask 1043456
    %v238 = vsel %vm236, %v232, 0
    %240 = vmatprep.subr.mxu0 0.0
    %241 = vmatpush1.msra.mxu0 %v238
    %242 = vmatprep.subr.mxu0 0.0
    %243 = vmatpush1.msra.mxu0 0.0
    %244 = vmatprep.subr.mxu0 0.0
    %245 = vmatpush1.msra.mxu0 0.0
    %246 = vmatprep.subr.mxu0 0.0
    %247 = vmatpush1.msra.mxu0 0.0
    %248 = vmatprep.subr.mxu0 0.0
    %249 = vmatpush1.msra.mxu0 0.0
    %250 = vmatprep.subr.mxu0 0.0
    %251 = vmatpush1.msra.mxu0 0.0
    %252 = vmatprep.subr.mxu0 0.0
    %253 = vmatpush1.msra.mxu0 0.0
    %254 = vmatprep.subr.mxu0 0.0
    %255 = vmatpush1.msra.mxu0 0.0
    %256 = vmatprep.subr.mxu0 0.0
    %257 = vmatpush1.msra.mxu0 0.0
    %258 = vmatprep.subr.mxu0 0.0
    %259 = vmatpush1.msra.mxu0 0.0
    %260 = vmatprep.subr.mxu0 0.0
    %261 = vmatpush1.msra.mxu0 0.0
    %262 = vmatprep.subr.mxu0 0.0
    %263 = vmatpush1.msra.mxu0 0.0
    %264 = vmatprep.subr.mxu0 0.0
    %265 = vmatpush1.msra.mxu0 0.0
    %266 = vmatprep.subr.mxu0 0.0
    %267 = vmatpush1.msra.mxu0 0.0
    %268 = vmatprep.subr.mxu0 0.0
    %269 = vmatpush1.msra.mxu0 0.0
    %270 = vmatprep.subr.mxu0 0.0
    %271 = vmatpush1.msra.mxu0 0.0
    %272 = vmatprep.subr.mxu0 0.0
    %273 = vmatpush1.msra.mxu0 0.0
    %274 = vmatprep.subr.mxu0 0.0
    %275 = vmatpush1.msra.mxu0 0.0
    %276 = vmatprep.subr.mxu0 0.0
    %277 = vmatpush1.msra.mxu0 0.0
    %278 = vmatprep.subr.mxu0 0.0
    %279 = vmatpush1.msra.mxu0 0.0
    %280 = vmatprep.subr.mxu0 0.0
    %281 = vmatpush1.msra.mxu0 0.0
    %282 = vmatprep.subr.mxu0 0.0
    %283 = vmatpush1.msra.mxu0 0.0
    %284 = vmatprep.subr.mxu0 0.0
    %285 = vmatpush1.msra.mxu0 0.0
    %286 = vmatprep.subr.mxu0 0.0
    %287 = vmatpush1.msra.mxu0 0.0
    %288 = vmatprep.subr.mxu0 0.0
    %289 = vmatpush1.msra.mxu0 0.0
    %290 = vmatprep.subr.mxu0 0.0
    %291 = vmatpush1.msra.mxu0 0.0
    %292 = vmatprep.subr.mxu0 0.0
    %293 = vmatpush1.msra.mxu0 0.0
    %294 = vmatprep.subr.mxu0 0.0
    %295 = vmatpush1.msra.mxu0 0.0
    %296 = vmatprep.subr.mxu0 0.0
    %297 = vmatpush1.msra.mxu0 0.0
    %298 = vmatprep.subr.mxu0 0.0
    %299 = vmatpush1.msra.mxu0 0.0
    %300 = vmatprep.subr.mxu0 0.0
    %301 = vmatpush1.msra.mxu0 0.0
    %302 = vmatprep.subr.mxu0 0.0
    %303 = vmatpush1.msra.mxu0 0.0
    %304 = vmatprep.mubr.f32.mxu0 0.0
    %305 = vmatmul.mubr.f32.gmra.mrb[0].mxu0 %v234
    %v306 = vpop.f32.mrb[0].mxu0
    %v307 = vadd.f32 0.0, %v306
    %v308 = vpop.f32.mrb[0].mxu0
    %309 = vdwg.mxu0
    %v310 = vmul.f32 %v42, %v307
    %v311 = vld [vmem:[%s7] sm:$0xff]
    %v312 = vld [vmem:[%s7 + $0x8] sm:$0xff]
    %v313 = vld [vmem:[%s7 + $0x10] sm:$0xff]
    %v314 = vld [vmem:[%s7 + $0x18] sm:$0xff]
    %v315 = vld [vmem:[%s7 + $0x20] sm:$0xff]
    %v316 = vld [vmem:[%s7 + $0x28] sm:$0xff]
    %v317 = vld [vmem:[%s7 + $0x30] sm:$0xff]
    %v318 = vld [vmem:[%s7 + $0x38] sm:$0xff]
    %v319 = vld [vmem:[%s7 + $0x40] sm:$0xff]
    %v320 = vld [vmem:[%s7 + $0x48] sm:$0xff]
    %v321 = vld [vmem:[%s7 + $0x50] sm:$0xff]
    %v322 = vld [vmem:[%s7 + $0x58] sm:$0xff]
    %v323 = vld [vmem:[%s7 + $0x60] sm:$0xff]
    %v324 = vld [vmem:[%s7 + $0x68] sm:$0xff]
    %v325 = vld [vmem:[%s7 + $0x70] sm:$0xff]
    %v326 = vld [vmem:[%s7 + $0x78] sm:$0xff]
    %327 = vmatprep.subr.mxu0 0.0
    %328 = vmatpush1.msra.mxu0 %v311
    %329 = vmatprep.subr.mxu0 0.0
    %330 = vmatpush1.msra.mxu0 %v312
    %331 = vmatprep.subr.mxu0 0.0
    %332 = vmatpush1.msra.mxu0 %v313
    %333 = vmatprep.subr.mxu0 0.0
    %334 = vmatpush1.msra.mxu0 %v314
    %335 = vmatprep.subr.mxu0 0.0
    %336 = vmatpush1.msra.mxu0 %v315
    %337 = vmatprep.subr.mxu0 0.0
    %338 = vmatpush1.msra.mxu0 %v316
    %339 = vmatprep.subr.mxu0 0.0
    %340 = vmatpush1.msra.mxu0 %v317
    %341 = vmatprep.subr.mxu0 0.0
    %342 = vmatpush1.msra.mxu0 %v318
    %343 = vmatprep.subr.mxu0 0.0
    %344 = vmatpush1.msra.mxu0 %v319
    %345 = vmatprep.subr.mxu0 0.0
    %346 = vmatpush1.msra.mxu0 %v320
    %347 = vmatprep.subr.mxu0 0.0
    %348 = vmatpush1.msra.mxu0 %v321
    %349 = vmatprep.subr.mxu0 0.0
    %350 = vmatpush1.msra.mxu0 %v322
    %351 = vmatprep.subr.mxu0 0.0
    %352 = vmatpush1.msra.mxu0 %v323
    %353 = vmatprep.subr.mxu0 0.0
    %354 = vmatpush1.msra.mxu0 %v324
    %355 = vmatprep.subr.mxu0 0.0
    %356 = vmatpush1.msra.mxu0 %v325
    %357 = vmatprep.subr.mxu0 0.0
    %358 = vmatpush1.msra.mxu0 %v326
    %359 = vmatprep.subr.mxu0 0.0
    %360 = vmatpush1.msra.mxu0 0.0
    %361 = vmatprep.subr.mxu0 0.0
    %362 = vmatpush1.msra.mxu0 0.0
    %363 = vmatprep.subr.mxu0 0.0
    %364 = vmatpush1.msra.mxu0 0.0
    %365 = vmatprep.subr.mxu0 0.0
    %366 = vmatpush1.msra.mxu0 0.0
    %367 = vmatprep.subr.mxu0 0.0
    %368 = vmatpush1.msra.mxu0 0.0
    %369 = vmatprep.subr.mxu0 0.0
    %370 = vmatpush1.msra.mxu0 0.0
    %371 = vmatprep.subr.mxu0 0.0
    %372 = vmatpush1.msra.mxu0 0.0
    %373 = vmatprep.subr.mxu0 0.0
    %374 = vmatpush1.msra.mxu0 0.0
    %375 = vmatprep.subr.mxu0 0.0
    %376 = vmatpush1.msra.mxu0 0.0
    %377 = vmatprep.subr.mxu0 0.0
    %378 = vmatpush1.msra.mxu0 0.0
    %379 = vmatprep.subr.mxu0 0.0
    %380 = vmatpush1.msra.mxu0 0.0
    %381 = vmatprep.subr.mxu0 0.0
    %382 = vmatpush1.msra.mxu0 0.0
    %383 = vmatprep.subr.mxu0 0.0
    %384 = vmatpush1.msra.mxu0 0.0
    %385 = vmatprep.subr.mxu0 0.0
    %386 = vmatpush1.msra.mxu0 0.0
    %387 = vmatprep.subr.mxu0 0.0
    %388 = vmatpush1.msra.mxu0 0.0
    %389 = vmatprep.subr.mxu0 0.0
    %390 = vmatpush1.msra.mxu0 0.0
    %391 = vmatprep.mubr.f32.mxu0 0.0
    %392 = vmatmul.mubr.f32.gmra.mrb[0].mxu0 %v310
    %v393 = vpop.f32.mrb[0].mxu0
    %v394 = vadd.f32 0.0, %v393
    %v395 = vpop.f32.mrb[0].mxu0
    %396 = vdwg.mxu0
    %v397 = vld [vmem:[#allocation2] sm:$0xff]
    %v398 = vadd.f32 %v397, %v394
    %vm399 = vcmask 261120
    %400 = vst.msk [vmem:[#allocation5] sm:$0xff] %vm399, %v398
    // Predicated region
    $region38: #{tpu_custom_call.1} parent=1 // pred_check
      _
    $region39: #{tpu_custom_call.1} parent=1 // pred_check_branch
      %402 = sbr.rel (0) target = $region41
    $region40: #{tpu_custom_call.1} parent=1 // pred_region
      %s404 = ssub.s32 128, 128
      %405 = vsyncadd [#allocation4], %s404
      %s407 = sshll.u32 [#allocation5], 4
      %s408 = int_to_ptr.vmem [resolvable:$true] %s407
      %410 = dma.vmem_to_hbm [thread:$0]  %s408, 128, %s8, [#allocation4]
    $region41: #{tpu_custom_call.1} parent=1 // pred_fallthru
      _
    // Predicated region
    $region42: #{tpu_custom_call.1} parent=1 // pred_check
      _
    $region43: #{tpu_custom_call.1} parent=1 // pred_check_branch
      %412 = sbr.rel (0) target = $region45
    $region44: #{tpu_custom_call.1} parent=1 // pred_region
      %413 = dma.done [#allocation4], 128
    $region45: #{tpu_custom_call.1} parent=1 // pred_fallthru
      _
    %414 = vsyncpa [#allocation3], 1
    %415 = vsyncpa [#allocation4], 1

</llo_original>
